<compile_context>
chip_gen: v7x
topology: tpu7x:2x2x1
jax: 0.10.0
libtpu: 0.0.40
codegen_flags: <defaults>
</compile_context>

<pallas_src>
import functools

import jax
import jax.numpy as jnp
from jax.experimental import pallas as pl
from jax.experimental.pallas import tpu as pltpu

INPUT_DIM = 1
NUM_MIXTURES = 5
OUTPUT_DIM = 1
HIDDEN = 64

OUT_COLS = 128   # single lane tile holding all three heads
MU_OFF = 32      # mu lanes start here
SIG_OFF = 64     # sigma lanes start here


def _round_up(n, m):
    return ((n + m - 1) // m) * m


def _mdn_kernel(x_ref, w1b1_ref, w2_ref, b2_ref, w3p_ref, b3p_ref, out_ref,
                *, k, sig_off):
    # x tile: (tb, 1); weights are fully resident (constant index_maps).
    x = x_ref[...]

    # fc1 (K = 1): outer-product broadcast on the VPU instead of an MXU matmul.
    w1 = w1b1_ref[0:1, :]                       # (1, 64)
    b1 = w1b1_ref[1:2, :]                       # (1, 64)
    h1 = jnp.maximum(x * w1 + b1, 0.0)          # (tb, 64)

    # fc2 + ReLU (MXU, f32 accumulate).
    h2 = jnp.dot(h1, w2_ref[...], preferred_element_type=jnp.float32) + b2_ref[...]
    h2 = jnp.maximum(h2, 0.0)

    # fc3 into the packed 128-lane head layout:
    #   lanes [0,k) pi logits, [MU_OFF,MU_OFF+k) mu, [SIG_OFF,SIG_OFF+k) log sigma.
    params = jnp.dot(h2, w3p_ref[...], preferred_element_type=jnp.float32) + b3p_ref[...]

    lane = jax.lax.broadcasted_iota(jnp.int32, params.shape, 1)

    # Softmax over the k valid pi lanes only.
    pi_valid = lane < k
    logits = jnp.where(pi_valid, params, jnp.float32(-1e30))
    m = jnp.max(logits, axis=-1, keepdims=True)
    e = jnp.where(pi_valid, jnp.exp(logits - m), 0.0)
    denom = jnp.sum(e, axis=-1, keepdims=True)
    r = pl.reciprocal(denom, approx=True)       # EUP vrcp
    r = r * (2.0 - denom * r)                   # one Newton step -> full f32 accuracy
    pi = e * r

    # exp only on the sigma lane range (padded sigma lanes see exp(0)=1, harmless).
    sig_lanes = lane >= sig_off
    sigma = jnp.exp(jnp.where(sig_lanes, params, 0.0))

    # Single lane-dense, tile-aligned store of the packed output.
    out_ref[...] = jnp.where(pi_valid, pi, jnp.where(sig_lanes, sigma, params))


def mdn_forward(x, w1, b1, w2, b2, w3, b3, *, num_mixtures=NUM_MIXTURES,
                output_dim=OUTPUT_DIM, tile_b=2048):
    """x: (B, input_dim); weights in (in_features, out_features) layout."""
    k = num_mixtures * output_dim
    assert k <= MU_OFF, "packed 128-lane head layout requires k <= 32"
    b = x.shape[0]

    # --- wrapper-side packing (layout plumbing, zero in-kernel cost) ---------
    # fc1 weight + bias packed into one (2, 64) array.
    w1b1 = jnp.concatenate(
        [w1.reshape(1, HIDDEN), b1.reshape(1, HIDDEN)], axis=0).astype(jnp.float32)
    b2r = b2.reshape(1, HIDDEN).astype(jnp.float32)

    # fc3 weight/bias scattered into the packed 128-lane head layout.
    w3f = w3.astype(jnp.float32)
    b3f = b3.reshape(-1).astype(jnp.float32)
    w3p = jnp.zeros((HIDDEN, OUT_COLS), jnp.float32)
    b3p = jnp.zeros((1, OUT_COLS), jnp.float32)
    for h, off in enumerate((0, MU_OFF, SIG_OFF)):
        w3p = w3p.at[:, off:off + k].set(w3f[:, h * k:(h + 1) * k])
        b3p = b3p.at[:, off:off + k].set(b3f[h * k:(h + 1) * k].reshape(1, k))

    # --- batch tiling ---------------------------------------------------------
    b8 = _round_up(b, 8)
    tb = _round_up(min(tile_b, b8), 8)
    if b8 > 8:
        # Cap the tile at ceil(B/2) so the grid has >=2 steps (v7x megacore).
        tb = min(tb, _round_up(-(-b8 // 2), 8))
    tb = max(tb, 8)
    bp = _round_up(b, tb)
    xp = x.astype(jnp.float32)
    if bp != b:
        xp = jnp.pad(xp, ((0, bp - b), (0, 0)))
    grid = (bp // tb,)

    cost = pl.CostEstimate(
        flops=2 * bp * (INPUT_DIM * HIDDEN + HIDDEN * HIDDEN + HIDDEN * OUT_COLS),
        transcendentals=bp * 2 * OUT_COLS,
        bytes_accessed=4 * (bp * (INPUT_DIM + OUT_COLS)
                            + 2 * HIDDEN + HIDDEN * HIDDEN + HIDDEN
                            + HIDDEN * OUT_COLS + OUT_COLS),
    )

    out = pl.pallas_call(
        functools.partial(_mdn_kernel, k=k, sig_off=SIG_OFF),
        out_shape=jax.ShapeDtypeStruct((bp, OUT_COLS), jnp.float32),
        grid=grid,
        in_specs=[
            pl.BlockSpec((tb, INPUT_DIM), lambda i: (i, 0)),       # x tile
            pl.BlockSpec((2, HIDDEN), lambda i: (0, 0)),           # w1/b1 (resident)
            pl.BlockSpec((HIDDEN, HIDDEN), lambda i: (0, 0)),      # w2
            pl.BlockSpec((1, HIDDEN), lambda i: (0, 0)),           # b2
            pl.BlockSpec((HIDDEN, OUT_COLS), lambda i: (0, 0)),    # w3 (packed heads)
            pl.BlockSpec((1, OUT_COLS), lambda i: (0, 0)),         # b3 (packed heads)
        ],
        out_specs=pl.BlockSpec((tb, OUT_COLS), lambda i: (i, 0)),
        compiler_params=pltpu.CompilerParams(
            dimension_semantics=("parallel",)),
        cost_estimate=cost,
    )(xp, w1b1, w2.astype(jnp.float32), b2r, w3p, b3p)

    pi = out[:b, 0:k]
    mu = out[:b, MU_OFF:MU_OFF + k]
    sigma = out[:b, SIG_OFF:SIG_OFF + k]
    return pi, mu, sigma


def init_params(key):
    """Deterministic init mimicking nn.Linear default (uniform +/- 1/sqrt(fan_in))."""
    k1, k2, k3, k4, k5, k6 = jax.random.split(key, 6)
    out3 = NUM_MIXTURES * 3 * OUTPUT_DIM

    def lin(kw, kb, fan_in, fan_out):
        bound = 1.0 / jnp.sqrt(jnp.float32(fan_in))
        w = jax.random.uniform(kw, (fan_in, fan_out), jnp.float32, -bound, bound)
        b = jax.random.uniform(kb, (1, fan_out), jnp.float32, -bound, bound)
        return w, b

    w1, b1 = lin(k1, k2, INPUT_DIM, HIDDEN)
    w2, b2 = lin(k3, k4, HIDDEN, HIDDEN)
    w3, b3 = lin(k5, k6, HIDDEN, out3)
    return w1, b1, w2, b2, w3, b3


def reference_forward(x, w1, b1, w2, b2, w3, b3):
    h1 = jnp.maximum(x @ w1 + b1, 0.0)
    h2 = jnp.maximum(h1 @ w2 + b2, 0.0)
    params = h2 @ w3 + b3
    k = NUM_MIXTURES * OUTPUT_DIM
    pi, mu, sig = params[:, :k], params[:, k:2 * k], params[:, 2 * k:]
    return jax.nn.softmax(pi, axis=-1), mu, jnp.exp(sig)


if __name__ == "__main__":
    key = jax.random.PRNGKey(0)
    kx, kp = jax.random.split(key)
    w1, b1, w2, b2, w3, b3 = init_params(kp)

    # Small primary check (single grid step).
    batch = 8
    x = jax.random.normal(kx, (batch, INPUT_DIM), jnp.float32)
    pi, mu, sigma = mdn_forward(x, w1, b1, w2, b2, w3, b3)
    jax.block_until_ready((pi, mu, sigma))

    rpi, rmu, rsig = reference_forward(x, w1, b1, w2, b2, w3, b3)
    assert jnp.allclose(pi, rpi, atol=1e-5, rtol=1e-5)
    assert jnp.allclose(mu, rmu, atol=1e-5, rtol=1e-5)
    assert jnp.allclose(sigma, rsig, atol=1e-5, rtol=1e-5)
    assert jnp.allclose(jnp.sum(pi, axis=-1), 1.0, atol=1e-5)

    # Second check exercising multi-step grid + batch padding (non-multiple B).
    batch2 = 100
    x2 = jax.random.normal(kx, (batch2, INPUT_DIM), jnp.float32)
    pi2, mu2, sig2 = mdn_forward(x2, w1, b1, w2, b2, w3, b3, tile_b=32)
    jax.block_until_ready((pi2, mu2, sig2))
    rpi2, rmu2, rsig2 = reference_forward(x2, w1, b1, w2, b2, w3, b3)
    assert jnp.allclose(pi2, rpi2, atol=1e-5, rtol=1e-5)
    assert jnp.allclose(mu2, rmu2, atol=1e-5, rtol=1e-5)
    assert jnp.allclose(sig2, rsig2, atol=1e-5, rtol=1e-5)

    print("KERNEL_OK")
</pallas_src>

<mosaic_0001>
module attributes {stable_mosaic.version = 11 : i64} {
  func.func @_mdn_kernel(%arg0: i32, %arg1: memref<8x1xf32, #tpu.memory_space<vmem>>, %arg2: memref<2x64xf32, #tpu.memory_space<vmem>>, %arg3: memref<64x64xf32, #tpu.memory_space<vmem>>, %arg4: memref<1x64xf32, #tpu.memory_space<vmem>>, %arg5: memref<64x128xf32, #tpu.memory_space<vmem>>, %arg6: memref<1x128xf32, #tpu.memory_space<vmem>>, %arg7: memref<8x128xf32, #tpu.memory_space<vmem>>) attributes {dimension_semantics = [#tpu.dimension_semantics<parallel>], iteration_bounds = array<i64: 1>, scalar_prefetch = 0 : i64, scratch_operands = 0 : i64, tpu.core_type = #tpu.core_type<tc>, window_params = [{transform_indices = @transform_0, window_bounds = array<i64: 8, 1>}, {pipeline_mode = #tpu.pipeline_mode<synchronous>, transform_indices = @transform_1, window_bounds = array<i64: 2, 64>}, {pipeline_mode = #tpu.pipeline_mode<synchronous>, transform_indices = @transform_2, window_bounds = array<i64: 64, 64>}, {pipeline_mode = #tpu.pipeline_mode<synchronous>, transform_indices = @transform_3, window_bounds = array<i64: 1, 64>}, {pipeline_mode = #tpu.pipeline_mode<synchronous>, transform_indices = @transform_4, window_bounds = array<i64: 64, 128>}, {pipeline_mode = #tpu.pipeline_mode<synchronous>, transform_indices = @transform_5, window_bounds = array<i64: 1, 128>}, {transform_indices = @transform_6, window_bounds = array<i64: 8, 128>}]} {
    %c0 = arith.constant 0 : index
    %c0_0 = arith.constant 0 : index
    %0 = vector.load %arg1[%c0, %c0_0] : memref<8x1xf32, #tpu.memory_space<vmem>>, vector<8x1xf32>
    %c0_1 = arith.constant 0 : index
    %c0_2 = arith.constant 0 : index
    %1 = vector.load %arg2[%c0_1, %c0_2] : memref<2x64xf32, #tpu.memory_space<vmem>>, vector<1x64xf32>
    %c1 = arith.constant 1 : index
    %c0_3 = arith.constant 0 : index
    %2 = vector.load %arg2[%c1, %c0_3] : memref<2x64xf32, #tpu.memory_space<vmem>>, vector<1x64xf32>
    %3 = vector.broadcast %0 : vector<8x1xf32> to vector<8x64xf32>
    %4 = vector.broadcast %1 : vector<1x64xf32> to vector<8x64xf32>
    %5 = arith.mulf %3, %4 : vector<8x64xf32>
    %6 = vector.broadcast %2 : vector<1x64xf32> to vector<8x64xf32>
    %7 = arith.addf %5, %6 : vector<8x64xf32>
    %cst = arith.constant 0.000000e+00 : f32
    %8 = vector.broadcast %cst : f32 to vector<8x64xf32>
    %9 = arith.maximumf %7, %8 : vector<8x64xf32>
    %c0_4 = arith.constant 0 : index
    %c0_5 = arith.constant 0 : index
    %10 = vector.load %arg3[%c0_4, %c0_5] : memref<64x64xf32, #tpu.memory_space<vmem>>, vector<64x64xf32>
    %cst_6 = arith.constant dense<0.000000e+00> : vector<8x64xf32>
    %11 = tpu.matmul %9, %10, %cst_6 {dimension_numbers = #tpu.dot_dimension_numbers<[1], [0], [0], [1], [0, 0, 1, 1], [], []>} : vector<8x64xf32>, vector<64x64xf32>, vector<8x64xf32> -> vector<8x64xf32>
    %c0_7 = arith.constant 0 : index
    %c0_8 = arith.constant 0 : index
    %12 = vector.load %arg4[%c0_7, %c0_8] : memref<1x64xf32, #tpu.memory_space<vmem>>, vector<1x64xf32>
    %13 = vector.broadcast %12 : vector<1x64xf32> to vector<8x64xf32>
    %14 = arith.addf %11, %13 : vector<8x64xf32>
    %cst_9 = arith.constant 0.000000e+00 : f32
    %15 = vector.broadcast %cst_9 : f32 to vector<8x64xf32>
    %16 = arith.maximumf %14, %15 : vector<8x64xf32>
    %c0_10 = arith.constant 0 : index
    %c0_11 = arith.constant 0 : index
    %17 = vector.load %arg5[%c0_10, %c0_11] : memref<64x128xf32, #tpu.memory_space<vmem>>, vector<64x128xf32>
    %cst_12 = arith.constant dense<0.000000e+00> : vector<8x128xf32>
    %18 = tpu.matmul %16, %17, %cst_12 {dimension_numbers = #tpu.dot_dimension_numbers<[1], [0], [0], [1], [0, 0, 1, 1], [], []>} : vector<8x64xf32>, vector<64x128xf32>, vector<8x128xf32> -> vector<8x128xf32>
    %c0_13 = arith.constant 0 : index
    %c0_14 = arith.constant 0 : index
    %19 = vector.load %arg6[%c0_13, %c0_14] : memref<1x128xf32, #tpu.memory_space<vmem>>, vector<1x128xf32>
    %20 = vector.broadcast %19 : vector<1x128xf32> to vector<8x128xf32>
    %21 = arith.addf %18, %20 : vector<8x128xf32>
    %22 = tpu.iota {dimensions = array<i32: 1>} : vector<8x128xi32>
    %c5_i32 = arith.constant 5 : i32
    %23 = vector.broadcast %c5_i32 : i32 to vector<8x128xi32>
    %24 = arith.cmpi slt, %22, %23 : vector<8x128xi32>
    %cst_15 = arith.constant -1.000000e+30 : f32
    %25 = vector.broadcast %cst_15 : f32 to vector<8x128xf32>
    %26 = arith.select %24, %21, %25 : vector<8x128xi1>, vector<8x128xf32>
    %cst_16 = arith.constant dense<0xFF800000> : vector<8xf32>
    %27 = vector.multi_reduction <maximumf>, %26, %cst_16 [1] : vector<8x128xf32> to vector<8xf32>
    %28 = vector.shape_cast %27 : vector<8xf32> to vector<8x1xf32>
    %29 = vector.broadcast %28 : vector<8x1xf32> to vector<8x128xf32>
    %30 = arith.subf %26, %29 : vector<8x128xf32>
    %31 = math.exp %30 : vector<8x128xf32>
    %cst_17 = arith.constant 0.000000e+00 : f32
    %32 = vector.broadcast %cst_17 : f32 to vector<8x128xf32>
    %33 = arith.select %24, %31, %32 : vector<8x128xi1>, vector<8x128xf32>
    %cst_18 = arith.constant dense<0.000000e+00> : vector<8xf32>
    %34 = vector.multi_reduction <add>, %33, %cst_18 [1] : vector<8x128xf32> to vector<8xf32>
    %35 = vector.shape_cast %34 : vector<8xf32> to vector<8x1xf32>
    %36 = tpu.reciprocal %35 {approx = true} : vector<8x1xf32> -> vector<8x1xf32>
    %37 = arith.mulf %35, %36 : vector<8x1xf32>
    %cst_19 = arith.constant 2.000000e+00 : f32
    %38 = vector.broadcast %cst_19 : f32 to vector<8x1xf32>
    %39 = arith.subf %38, %37 : vector<8x1xf32>
    %40 = arith.mulf %36, %39 : vector<8x1xf32>
    %41 = vector.broadcast %40 : vector<8x1xf32> to vector<8x128xf32>
    %42 = arith.mulf %33, %41 : vector<8x128xf32>
    %c64_i32 = arith.constant 64 : i32
    %43 = vector.broadcast %c64_i32 : i32 to vector<8x128xi32>
    %44 = arith.cmpi sge, %22, %43 : vector<8x128xi32>
    %cst_20 = arith.constant 0.000000e+00 : f32
    %45 = vector.broadcast %cst_20 : f32 to vector<8x128xf32>
    %46 = arith.select %44, %21, %45 : vector<8x128xi1>, vector<8x128xf32>
    %47 = math.exp %46 : vector<8x128xf32>
    %48 = arith.select %44, %47, %21 : vector<8x128xi1>, vector<8x128xf32>
    %49 = arith.select %24, %42, %48 : vector<8x128xi1>, vector<8x128xf32>
    %c0_21 = arith.constant 0 : index
    %c0_22 = arith.constant 0 : index
    %50 = vector.load %arg7[%c0_21, %c0_22] : memref<8x128xf32, #tpu.memory_space<vmem>>, vector<8x128xf32>
    tpu.vector_store %arg7[%c0_21, %c0_22], %49 {strides = array<i32>} : memref<8x128xf32, #tpu.memory_space<vmem>>, vector<8x128xf32>,
    return
  }
  func.func @transform_0(%arg0: i32) -> (i32, i32) {
    %c0_i32 = arith.constant 0 : i32
    %c0_i32_0 = arith.constant 0 : i32
    return %arg0, %c0_i32 : i32, i32
  }
  func.func @transform_1(%arg0: i32) -> (i32, i32) {
    %c0_i32 = arith.constant 0 : i32
    %c0_i32_0 = arith.constant 0 : i32
    %c0_i32_1 = arith.constant 0 : i32
    return %c0_i32, %c0_i32_0 : i32, i32
  }
  func.func @transform_2(%arg0: i32) -> (i32, i32) {
    %c0_i32 = arith.constant 0 : i32
    %c0_i32_0 = arith.constant 0 : i32
    %c0_i32_1 = arith.constant 0 : i32
    return %c0_i32, %c0_i32_0 : i32, i32
  }
  func.func @transform_3(%arg0: i32) -> (i32, i32) {
    %c0_i32 = arith.constant 0 : i32
    %c0_i32_0 = arith.constant 0 : i32
    %c0_i32_1 = arith.constant 0 : i32
    return %c0_i32, %c0_i32_0 : i32, i32
  }
  func.func @transform_4(%arg0: i32) -> (i32, i32) {
    %c0_i32 = arith.constant 0 : i32
    %c0_i32_0 = arith.constant 0 : i32
    %c0_i32_1 = arith.constant 0 : i32
    return %c0_i32, %c0_i32_0 : i32, i32
  }
  func.func @transform_5(%arg0: i32) -> (i32, i32) {
    %c0_i32 = arith.constant 0 : i32
    %c0_i32_0 = arith.constant 0 : i32
    %c0_i32_1 = arith.constant 0 : i32
    return %c0_i32, %c0_i32_0 : i32, i32
  }
  func.func @transform_6(%arg0: i32) -> (i32, i32) {
    %c0_i32 = arith.constant 0 : i32
    %c0_i32_0 = arith.constant 0 : i32
    return %arg0, %c0_i32 : i32, i32
  }
}

</mosaic_0001>

<llo_original>
// kernel: tpu_custom_call.1
$region0: #{tpu_custom_call.1}
  #allocation0 [shape = 'u32[]', space=smem, size = 0x4, offset = 0x4, fixed_abs, tag = 'smem constant byte address 0x4 - core index']
  #allocation1 [shape = 'u32[144,128]{1,0:T(1,128)}', space=vmem, size = 0x12000, scoped, tag = 'internal scratch']
  %s0 = inlined_call_operand.vmem [shape: f32[8,1], index: 0, kind: input, shape index: {}]
  %s1 = inlined_call_operand.vmem [shape: f32[2,64], index: 1, kind: input, shape index: {}]
  %s2 = inlined_call_operand.hbm [shape: f32[64,64], index: 2, kind: input, shape index: {}]
  %s3 = inlined_call_operand.vmem [shape: f32[1,64], index: 3, kind: input, shape index: {}]
  %s4 = inlined_call_operand.hbm [shape: f32[64,128], index: 4, kind: input, shape index: {}]
  %s5 = inlined_call_operand.vmem [shape: f32[1,128], index: 5, kind: input, shape index: {}]
  %s6 = inlined_call_operand.hbm [shape: f32[8,128], index: 6, kind: output, shape index: {}]
  %s7 = sld [smem:[#allocation0]]
  $region42: #{tpu_custom_call.1} parent=0
    _
  %s9 = ssub.s32 1, %s7
  %s10 = scalar_select 0, %s9, %s7
  $region1: #{tpu_custom_call.1} parent=0
    #allocation2 [shape = 'u8[32768]{0}', space=vmem, size = 0x8000, scoped, tag = 'input window, operand 2, single buffered']
    #allocation3 [shape = 's32[1]{0}', space=sflag, size = 0x4, scoped, tag = 'scoped memory for tpu_custom_call.1']
    #allocation4 [shape = 's32[1]{0}', space=sflag, size = 0x4, scoped, tag = 'scoped memory for tpu_custom_call.1']
    #allocation5 [shape = 'u8[32768]{0}', space=vmem, size = 0x8000, scoped, tag = 'input window, operand 4, single buffered']
    #allocation6 [shape = 's32[1]{0}', space=sflag, size = 0x4, scoped, tag = 'scoped memory for tpu_custom_call.1']
    #allocation7 [shape = 'u8[4096]{0}', space=vmem, size = 0x1000, scoped, tag = 'output window, operand 0, single buffered']
    %11 = vsyncpa [#allocation3], 0
    %12 = vsyncpa [#allocation6], 0
    %13 = vsyncpa [#allocation4], 0
    // Predicated region
    $region2: #{tpu_custom_call.1} parent=1 // pred_check
      _
    $region3: #{tpu_custom_call.1} parent=1 // pred_check_branch
      %15 = sbr.rel (0) target = $region5
    $region4: #{tpu_custom_call.1} parent=1 // pred_region
      _
    $region5: #{tpu_custom_call.1} parent=1 // pred_fallthru
      _
    // Predicated region
    $region6: #{tpu_custom_call.1} parent=1 // pred_check
      _
    $region7: #{tpu_custom_call.1} parent=1 // pred_check_branch
      %17 = sbr.rel (0) target = $region9
    $region8: #{tpu_custom_call.1} parent=1 // pred_region
      _
    $region9: #{tpu_custom_call.1} parent=1 // pred_fallthru
      _
    // Predicated region
    $region10: #{tpu_custom_call.1} parent=1 // pred_check
      _
    $region11: #{tpu_custom_call.1} parent=1 // pred_check_branch
      %19 = sbr.rel (0) target = $region13
    $region12: #{tpu_custom_call.1} parent=1 // pred_region
      %s21 = ssub.s32 1024, 1024
      %22 = vsyncadd [#allocation3], %s21
      %s23 = sshll.u32 [#allocation2], 4
      %s24 = int_to_ptr.vmem [resolvable:$true] %s23
      %29 = dma.hbm_to_vmem [thread:$0]  %s2, 1024, %s24, [#allocation3], 128, 128, 8
    $region13: #{tpu_custom_call.1} parent=1 // pred_fallthru
      _
    // Predicated region
    $region14: #{tpu_custom_call.1} parent=1 // pred_check
      _
    $region15: #{tpu_custom_call.1} parent=1 // pred_check_branch
      %31 = sbr.rel (0) target = $region17
    $region16: #{tpu_custom_call.1} parent=1 // pred_region
      _
    $region17: #{tpu_custom_call.1} parent=1 // pred_fallthru
      _
    // Predicated region
    $region18: #{tpu_custom_call.1} parent=1 // pred_check
      _
    $region19: #{tpu_custom_call.1} parent=1 // pred_check_branch
      %33 = sbr.rel (0) target = $region21
    $region20: #{tpu_custom_call.1} parent=1 // pred_region
      %s35 = ssub.s32 1024, 1024
      %36 = vsyncadd [#allocation6], %s35
      %s37 = sshll.u32 [#allocation5], 4
      %s38 = int_to_ptr.vmem [resolvable:$true] %s37
      %43 = dma.hbm_to_vmem [thread:$0]  %s4, 1024, %s38, [#allocation6], 128, 128, 8
    $region21: #{tpu_custom_call.1} parent=1 // pred_fallthru
      _
    // Predicated region
    $region22: #{tpu_custom_call.1} parent=1 // pred_check
      _
    $region23: #{tpu_custom_call.1} parent=1 // pred_check_branch
      %45 = sbr.rel (0) target = $region25
    $region24: #{tpu_custom_call.1} parent=1 // pred_region
      _
    $region25: #{tpu_custom_call.1} parent=1 // pred_fallthru
      _
    // Predicated region
    $region26: #{tpu_custom_call.1} parent=1 // pred_check
      _
    $region27: #{tpu_custom_call.1} parent=1 // pred_check_branch
      %47 = sbr.rel (0) target = $region29
    $region28: #{tpu_custom_call.1} parent=1 // pred_region
      %48 = dma.done [#allocation3], 1024
    $region29: #{tpu_custom_call.1} parent=1 // pred_fallthru
      _
    // Predicated region
    $region30: #{tpu_custom_call.1} parent=1 // pred_check
      _
    $region31: #{tpu_custom_call.1} parent=1 // pred_check_branch
      %50 = sbr.rel (0) target = $region33
    $region32: #{tpu_custom_call.1} parent=1 // pred_region
      %51 = dma.done [#allocation6], 1024
    $region33: #{tpu_custom_call.1} parent=1 // pred_fallthru
      _
    %v52 = vld [vmem:[%s0] sm:$0xff]
    %v53 = vld [vmem:[%s1] sm:$0x1]
    %v54 = vld [vmem:[%s1 + $0x1] sm:$0x1]
    %56 = vset.pattern.permute.xlu0 0
    %57 = vperm.xlu0 %56, %v52
    %v58 = vpop.permute.xlu0 %57
    %v60 = vlaneseq
    %v61 = vshrl.u32 %v60, 7
    %v62 = vsub.s32 0, %v61
    %v63 = vrot.slane %v53, %v62
    %v64 = vmul.f32 %v58, %v63
    %v65 = vlaneseq
    %v66 = vshrl.u32 %v65, 7
    %v67 = vsub.s32 0, %v66
    %v68 = vrot.slane %v54, %v67
    %v69 = vadd.f32 %v64, %v68
    %v70 = vmax.f32 %v69, 0.0
    %v71 = vld [vmem:[#allocation2] sm:$0xff]
    %v72 = vld [vmem:[#allocation2 + $0x8] sm:$0xff]
    %v73 = vld [vmem:[#allocation2 + $0x10] sm:$0xff]
    %v74 = vld [vmem:[#allocation2 + $0x18] sm:$0xff]
    %v75 = vld [vmem:[#allocation2 + $0x20] sm:$0xff]
    %v76 = vld [vmem:[#allocation2 + $0x28] sm:$0xff]
    %v77 = vld [vmem:[#allocation2 + $0x30] sm:$0xff]
    %v78 = vld [vmem:[#allocation2 + $0x38] sm:$0xff]
    %v79 = vld [vmem:[%s3] sm:$0x1]
    %v81 = vlaneseq
    %v82 = vshrl.u32 %v81, 7
    %v83 = vsub.s32 0, %v82
    %v84 = vrot.slane %v79, %v83
    %vm86 = vcmask 523264
    %v88 = vsel %vm86, %v70, 0
    %90 = vmatprep.subr.mxu0 0.0
    %91 = vmatpush1.msra.mxu0 %v71
    %92 = vmatprep.subr.mxu0 0.0
    %93 = vmatpush1.msra.mxu0 %v72
    %94 = vmatprep.subr.mxu0 0.0
    %95 = vmatpush1.msra.mxu0 %v73
    %96 = vmatprep.subr.mxu0 0.0
    %97 = vmatpush1.msra.mxu0 %v74
    %98 = vmatprep.subr.mxu0 0.0
    %99 = vmatpush1.msra.mxu0 %v75
    %100 = vmatprep.subr.mxu0 0.0
    %101 = vmatpush1.msra.mxu0 %v76
    %102 = vmatprep.subr.mxu0 0.0
    %103 = vmatpush1.msra.mxu0 %v77
    %104 = vmatprep.subr.mxu0 0.0
    %105 = vmatpush1.msra.mxu0 %v78
    %106 = vmatprep.subr.mxu0 0.0
    %107 = vmatpush1.msra.mxu0 0.0
    %108 = vmatprep.subr.mxu0 0.0
    %109 = vmatpush1.msra.mxu0 0.0
    %110 = vmatprep.subr.mxu0 0.0
    %111 = vmatpush1.msra.mxu0 0.0
    %112 = vmatprep.subr.mxu0 0.0
    %113 = vmatpush1.msra.mxu0 0.0
    %114 = vmatprep.subr.mxu0 0.0
    %115 = vmatpush1.msra.mxu0 0.0
    %116 = vmatprep.subr.mxu0 0.0
    %117 = vmatpush1.msra.mxu0 0.0
    %118 = vmatprep.subr.mxu0 0.0
    %119 = vmatpush1.msra.mxu0 0.0
    %120 = vmatprep.subr.mxu0 0.0
    %121 = vmatpush1.msra.mxu0 0.0
    %122 = vmatprep.subr.mxu0 0.0
    %123 = vmatpush1.msra.mxu0 0.0
    %124 = vmatprep.subr.mxu0 0.0
    %125 = vmatpush1.msra.mxu0 0.0
    %126 = vmatprep.subr.mxu0 0.0
    %127 = vmatpush1.msra.mxu0 0.0
    %128 = vmatprep.subr.mxu0 0.0
    %129 = vmatpush1.msra.mxu0 0.0
    %130 = vmatprep.subr.mxu0 0.0
    %131 = vmatpush1.msra.mxu0 0.0
    %132 = vmatprep.subr.mxu0 0.0
    %133 = vmatpush1.msra.mxu0 0.0
    %134 = vmatprep.subr.mxu0 0.0
    %135 = vmatpush1.msra.mxu0 0.0
    %136 = vmatprep.subr.mxu0 0.0
    %137 = vmatpush1.msra.mxu0 0.0
    %138 = vmatprep.subr.mxu0 0.0
    %139 = vmatpush1.msra.mxu0 0.0
    %140 = vmatprep.subr.mxu0 0.0
    %141 = vmatpush1.msra.mxu0 0.0
    %142 = vmatprep.subr.mxu0 0.0
    %143 = vmatpush1.msra.mxu0 0.0
    %144 = vmatprep.subr.mxu0 0.0
    %145 = vmatpush1.msra.mxu0 0.0
    %146 = vmatprep.subr.mxu0 0.0
    %147 = vmatpush1.msra.mxu0 0.0
    %148 = vmatprep.subr.mxu0 0.0
    %149 = vmatpush1.msra.mxu0 0.0
    %150 = vmatprep.subr.mxu0 0.0
    %151 = vmatpush1.msra.mxu0 0.0
    %152 = vmatprep.subr.mxu0 0.0
    %153 = vmatpush1.msra.mxu0 0.0
    %154 = vmatprep.mubr.f32.mxu0 0.0
    %155 = vmatmul.mubr.f32.gmra.mrb[0].mxu0 %v88
    %v156 = vpop.f32.mrb[0].mxu0
    %v157 = vadd.f32 %v84, %v156
    %v158 = vpop.f32.mrb[0].mxu0
    %159 = vdwg.mxu0
    %v160 = vmax.f32 %v157, 0.0
    %v161 = vld [vmem:[#allocation5] sm:$0xff]
    %v162 = vld [vmem:[#allocation5 + $0x8] sm:$0xff]
    %v163 = vld [vmem:[#allocation5 + $0x10] sm:$0xff]
    %v164 = vld [vmem:[#allocation5 + $0x18] sm:$0xff]
    %v165 = vld [vmem:[#allocation5 + $0x20] sm:$0xff]
    %v166 = vld [vmem:[#allocation5 + $0x28] sm:$0xff]
    %v167 = vld [vmem:[#allocation5 + $0x30] sm:$0xff]
    %v168 = vld [vmem:[#allocation5 + $0x38] sm:$0xff]
    %v169 = vld [vmem:[%s5] sm:$0x1]
    %v171 = vlaneseq
    %v172 = vshrl.u32 %v171, 7
    %v173 = vsub.s32 0, %v172
    %v174 = vrot.slane %v169, %v173
    %v177 = vsel %vm86, %v160, 0
    %179 = vmatprep.subr.mxu0 0.0
    %180 = vmatpush1.msra.mxu0 %v161
    %181 = vmatprep.subr.mxu0 0.0
    %182 = vmatpush1.msra.mxu0 %v162
    %183 = vmatprep.subr.mxu0 0.0
    %184 = vmatpush1.msra.mxu0 %v163
    %185 = vmatprep.subr.mxu0 0.0
    %186 = vmatpush1.msra.mxu0 %v164
    %187 = vmatprep.subr.mxu0 0.0
    %188 = vmatpush1.msra.mxu0 %v165
    %189 = vmatprep.subr.mxu0 0.0
    %190 = vmatpush1.msra.mxu0 %v166
    %191 = vmatprep.subr.mxu0 0.0
    %192 = vmatpush1.msra.mxu0 %v167
    %193 = vmatprep.subr.mxu0 0.0
    %194 = vmatpush1.msra.mxu0 %v168
    %195 = vmatprep.subr.mxu0 0.0
    %196 = vmatpush1.msra.mxu0 0.0
    %197 = vmatprep.subr.mxu0 0.0
    %198 = vmatpush1.msra.mxu0 0.0
    %199 = vmatprep.subr.mxu0 0.0
    %200 = vmatpush1.msra.mxu0 0.0
    %201 = vmatprep.subr.mxu0 0.0
    %202 = vmatpush1.msra.mxu0 0.0
    %203 = vmatprep.subr.mxu0 0.0
    %204 = vmatpush1.msra.mxu0 0.0
    %205 = vmatprep.subr.mxu0 0.0
    %206 = vmatpush1.msra.mxu0 0.0
    %207 = vmatprep.subr.mxu0 0.0
    %208 = vmatpush1.msra.mxu0 0.0
    %209 = vmatprep.subr.mxu0 0.0
    %210 = vmatpush1.msra.mxu0 0.0
    %211 = vmatprep.subr.mxu0 0.0
    %212 = vmatpush1.msra.mxu0 0.0
    %213 = vmatprep.subr.mxu0 0.0
    %214 = vmatpush1.msra.mxu0 0.0
    %215 = vmatprep.subr.mxu0 0.0
    %216 = vmatpush1.msra.mxu0 0.0
    %217 = vmatprep.subr.mxu0 0.0
    %218 = vmatpush1.msra.mxu0 0.0
    %219 = vmatprep.subr.mxu0 0.0
    %220 = vmatpush1.msra.mxu0 0.0
    %221 = vmatprep.subr.mxu0 0.0
    %222 = vmatpush1.msra.mxu0 0.0
    %223 = vmatprep.subr.mxu0 0.0
    %224 = vmatpush1.msra.mxu0 0.0
    %225 = vmatprep.subr.mxu0 0.0
    %226 = vmatpush1.msra.mxu0 0.0
    %227 = vmatprep.subr.mxu0 0.0
    %228 = vmatpush1.msra.mxu0 0.0
    %229 = vmatprep.subr.mxu0 0.0
    %230 = vmatpush1.msra.mxu0 0.0
    %231 = vmatprep.subr.mxu0 0.0
    %232 = vmatpush1.msra.mxu0 0.0
    %233 = vmatprep.subr.mxu0 0.0
    %234 = vmatpush1.msra.mxu0 0.0
    %235 = vmatprep.subr.mxu0 0.0
    %236 = vmatpush1.msra.mxu0 0.0
    %237 = vmatprep.subr.mxu0 0.0
    %238 = vmatpush1.msra.mxu0 0.0
    %239 = vmatprep.subr.mxu0 0.0
    %240 = vmatpush1.msra.mxu0 0.0
    %241 = vmatprep.subr.mxu0 0.0
    %242 = vmatpush1.msra.mxu0 0.0
    %243 = vmatprep.mubr.f32.mxu0 0.0
    %244 = vmatmul.mubr.f32.gmra.mrb[0].mxu0 %v177
    %v245 = vpop.f32.mrb[0].mxu0
    %v246 = vadd.f32 %v174, %v245
    %v247 = vpop.f32.mrb[0].mxu0
    %248 = vdwg.mxu0
    %v249 = vlaneseq
    %v250 = vand.u32 %v249, 127
    %vm251 = vcmp.lt.s32.totalorder %v250, 5
    %v252 = vsel %vm251, %v246, -1e+30
    %253 = vmax.xlane.f32.xlu0 %v252
    %v254 = vpop.xlane.xlu0 %253
    %v255 = vsub.f32 %v252, %v254
    %v256 = vmul.f32 %v255, 1.442695
    %v257 = vpow.pop %v256
    %v258 = vsel %vm251, %v257, 0.0
    %259 = vadd.xlane.f32.xlu0 %v258
    %v260 = vpop.xlane.xlu0 %259
    %v261 = vrcp.pop %v260
    %v262 = vmul.f32 %v260, %v261
    %v263 = vsub.f32 2.0, %v262
    %v264 = vmul.f32 %v261, %v263
    %v265 = vmul.f32 %v258, %v264
    %vm266 = vcmp.ge.s32.totalorder %v250, 64
    %v267 = vsel %vm266, %v246, 0.0
    %v268 = vmul.f32 %v267, 1.442695
    %v269 = vpow.pop %v268
    %v270 = vsel %vm266, %v269, %v246
    %v271 = vsel %vm251, %v265, %v270
    %272 = vst [vmem:[#allocation7] sm:$0xff] %v271
    // Predicated region
    $region34: #{tpu_custom_call.1} parent=1 // pred_check
      _
    $region35: #{tpu_custom_call.1} parent=1 // pred_check_branch
      %274 = sbr.rel (0) target = $region37
    $region36: #{tpu_custom_call.1} parent=1 // pred_region
      %s276 = ssub.s32 128, 128
      %277 = vsyncadd [#allocation4], %s276
      %s279 = sshll.u32 [#allocation7], 4
      %s280 = int_to_ptr.vmem [resolvable:$true] %s279
      %282 = dma.vmem_to_hbm [thread:$0]  %s280, 128, %s6, [#allocation4]
    $region37: #{tpu_custom_call.1} parent=1 // pred_fallthru
      _
    // Predicated region
    $region38: #{tpu_custom_call.1} parent=1 // pred_check
      _
    $region39: #{tpu_custom_call.1} parent=1 // pred_check_branch
      %284 = sbr.rel (0) target = $region41
    $region40: #{tpu_custom_call.1} parent=1 // pred_region
      %285 = dma.done [#allocation4], 128
    $region41: #{tpu_custom_call.1} parent=1 // pred_fallthru
      _
    %286 = vsyncpa [#allocation3], 1
    %287 = vsyncpa [#allocation6], 1
    %288 = vsyncpa [#allocation4], 1

</llo_original>
